<compile_context>
chip_gen: v6e
topology: v6e:2x2x1
jax: 0.10.0
libtpu: 0.0.40
codegen_flags: <defaults>
</compile_context>

<pallas_src>
import math

import jax
import jax.numpy as jnp
from jax.experimental import pallas as pl
from jax.experimental.pallas import tpu as pltpu

NEG_SLOPE = 0.01  # nn.LeakyReLU default


# ----------------------------------------------------------------------------
# Kernel: one lane-dense MXU matmul per grid step, bias + LeakyReLU fused.
# ----------------------------------------------------------------------------
def _input_proj_kernel(x_ref, w_ref, b_ref, o_ref):
    # x_ref : (1, TQ, P*9*Cin)  bf16 packed im2col rows for this (batch, tile)
    # w_ref : (P*9*Cin, P*Cout) bf16 block-diagonal weights  kron(I_P, W2d)
    # b_ref : (1, P*Cout)       f32 bias tiled P times (matches packed lanes)
    # o_ref : (1, TQ, P*Cout)   packed, lane-dense output rows
    acc = jnp.dot(x_ref[0], w_ref[...], preferred_element_type=jnp.float32)
    acc = acc + b_ref[...]                           # broadcast over sublanes
    acc = jnp.where(acc > 0, acc, NEG_SLOPE * acc)   # LeakyReLU fused w/ store
    o_ref[0] = acc.astype(o_ref.dtype)


# ----------------------------------------------------------------------------
# Tile selection: VMEM-budgeted, roofline-capped, pipeline-aware.
# ----------------------------------------------------------------------------
def _pick_tq(rows, packed_k, packed_n, in_dsize, out_dsize, batch):
    """Row tile (multiple of 8) such that double-buffered in/out blocks plus the
    (double-buffered) weight fit in ~12 MiB (under v5e's 16 MiB scoped default),
    capped at 1024 rows, and small enough that the flattened grid has >= 8
    steps (pipeline ramp + v7x dual-TC)."""
    budget = 12 * 1024 * 1024
    fixed = 2 * (packed_k * packed_n * in_dsize + packed_n * 4)   # W + bias, x2 buf
    per_row = 2 * (packed_k * in_dsize + packed_n * out_dsize)    # in + out, x2 buf
    tq = (budget - fixed) // per_row
    tq = int(max(8, min(tq, 1024, rows)))
    tq = max(8, (tq // 8) * 8)
    while tq > 8 and batch * (-(-rows // tq)) < 8:
        tq = max(8, ((tq // 2) // 8) * 8)
    return tq


# ----------------------------------------------------------------------------
# Module factory: precomputes packed weights once, returns a jitted forward.
# ----------------------------------------------------------------------------
def make_input_proj(weight, bias, compute_dtype=jnp.bfloat16, out_dtype=jnp.float32):
    """weight: (Cout, Cin, 3, 3); bias: (Cout,).  Returns forward(x_nchw) ->
    (B, H*W, Cout), matching InputProj with norm_layer=None, stride=1."""
    Cout, Cin, kh, kw = weight.shape
    assert (kh, kw) == (3, 3), "InputProj uses a 3x3 conv"
    K = 9 * Cin

    # Row-packing factor so the output lane width P*Cout is a multiple of 128
    # (unmasked full-lane stores), capped so the kron-inflated contraction
    # P*K stays within one MXU K-tile (256) — no real MXU passes on zeros.
    P = 1 if Cout % 128 == 0 else 128 // math.gcd(Cout, 128)
    while P > 1 and P * K > 256:
        P //= 2

    # Weights: (Cout,Cin,3,3) -> (3,3,Cin,Cout) -> (9*Cin, Cout), then block-
    # diagonal kron(I_P, W2d) so the matmul output is produced already packed
    # along lanes.  Cast to bf16 (operand traffic); bias stays f32.
    w2d = jnp.transpose(weight, (2, 3, 1, 0)).reshape(K, Cout)
    w_bd = jnp.kron(jnp.eye(P, dtype=w2d.dtype), w2d).astype(compute_dtype)
    b_packed = jnp.tile(bias.astype(jnp.float32), (P,)).reshape(1, P * Cout)

    PK, PN = P * K, P * Cout
    in_dsize = jnp.dtype(compute_dtype).itemsize
    out_dsize = jnp.dtype(out_dtype).itemsize

    def forward(x_nchw):
        B, _, H, W = x_nchw.shape
        HW = H * W

        # ---- im2col (bf16).  With allow_input_fusion XLA may fuse this
        # producer into the pallas operand stream instead of materializing the
        # 9x-amplified array in HBM.  Tap order (dy, dx, cin) matches w2d.
        x_nhwc = jnp.transpose(x_nchw, (0, 2, 3, 1)).astype(compute_dtype)
        x_pad = jnp.pad(x_nhwc, ((0, 0), (1, 1), (1, 1), (0, 0)))
        patches = jnp.concatenate(
            [x_pad[:, dy:dy + H, dx:dx + W, :]
             for dy in range(3) for dx in range(3)],
            axis=-1,
        ).reshape(B, HW, K)

        # ---- pad pixels to a multiple of P*TQ (never degrade P), pack P
        # consecutive output pixels into the lane axis of one row.
        rows = -(-HW // P)
        TQ = _pick_tq(rows, PK, PN, in_dsize, out_dsize, B)
        rows_pad = (-(-rows // TQ)) * TQ
        pix_pad = rows_pad * P
        if pix_pad != HW:
            patches = jnp.pad(patches, ((0, 0), (0, pix_pad - HW), (0, 0)))
        patches = patches.reshape(B, rows_pad, PK)

        grid = (B, rows_pad // TQ)
        cost = pl.CostEstimate(
            flops=2 * B * rows_pad * PK * PN,
            transcendentals=0,
            bytes_accessed=(B * rows_pad * PK * in_dsize
                            + PK * PN * in_dsize + PN * 4
                            + B * rows_pad * PN * out_dsize),
        )

        out_packed = pl.pallas_call(
            _input_proj_kernel,
            out_shape=jax.ShapeDtypeStruct((B, rows_pad, PN), out_dtype),
            grid_spec=pltpu.PrefetchScalarGridSpec(
                num_scalar_prefetch=0,
                grid=grid,
                in_specs=[
                    pl.BlockSpec((1, TQ, PK), lambda b, r: (b, r, 0)),
                    pl.BlockSpec((PK, PN), lambda b, r: (0, 0)),
                    pl.BlockSpec((1, PN), lambda b, r: (0, 0)),
                ],
                out_specs=pl.BlockSpec((1, TQ, PN), lambda b, r: (b, r, 0)),
            ),
            compiler_params=pltpu.CompilerParams(
                dimension_semantics=("parallel", "parallel"),
                allow_input_fusion=[True, False, False],
                vmem_limit_bytes=32 * 1024 * 1024,
            ),
            cost_estimate=cost,
        )(patches, w_bd, b_packed)

        # (B, rows_pad, P*Cout) -> (B, rows_pad*P, Cout) is metadata-only;
        # slice off the padded pixels.
        return out_packed.reshape(B, rows_pad * P, Cout)[:, :HW, :]

    return jax.jit(forward)


# ----------------------------------------------------------------------------
# Pure-JAX reference: Conv2d(k=3, s=1, p=1) + LeakyReLU + flatten/transpose.
# ----------------------------------------------------------------------------
def _reference(x_nchw, weight, bias):
    y = jax.lax.conv_general_dilated(
        x_nchw, weight,
        window_strides=(1, 1), padding=((1, 1), (1, 1)),
        dimension_numbers=("NCHW", "OIHW", "NCHW"),
    ) + bias[None, :, None, None]
    y = jnp.where(y > 0, y, NEG_SLOPE * y)
    B, Cout, H, W = y.shape
    return jnp.transpose(y.reshape(B, Cout, H * W), (0, 2, 1))


if __name__ == "__main__":
    B, Cin, H, W = 2, 4, 16, 16
    Cout = 32

    key = jax.random.PRNGKey(0)
    kx, kw, kb = jax.random.split(key, 3)
    x = jax.random.normal(kx, (B, Cin, H, W), dtype=jnp.float32)
    # Deterministic synthetic parameters (PyTorch shapes: (Cout,Cin,3,3), (Cout,))
    fan_in = Cin * 9
    bound = 1.0 / math.sqrt(fan_in)
    weight = jax.random.uniform(kw, (Cout, Cin, 3, 3), jnp.float32, -bound, bound)
    bias = jax.random.uniform(kb, (Cout,), jnp.float32, -bound, bound)

    fwd = make_input_proj(weight, bias)
    out = jax.block_until_ready(fwd(x))
    assert out.shape == (B, H * W, Cout)

    # Tight check: reference fed the same bf16-rounded operands (isolates the
    # kernel's im2col / kron packing / bias / LeakyReLU / padding logic).
    xq = x.astype(jnp.bfloat16).astype(jnp.float32)
    wq = weight.astype(jnp.bfloat16).astype(jnp.float32)
    ref_q = _reference(xq, wq, bias)
    assert jnp.allclose(out, ref_q, atol=2e-3, rtol=2e-3), "mismatch vs bf16 reference"

    # Loose check vs the exact f32 module semantics (bf16 operand rounding only).
    ref = _reference(x, weight, bias)
    assert jnp.allclose(out, ref, atol=5e-2, rtol=5e-2), "mismatch vs f32 reference"

    print("KERNEL_OK")
</pallas_src>

<mosaic_0001>
module attributes {stable_mosaic.version = 11 : i64} {
  func.func @_input_proj_kernel(%arg0: i32, %arg1: i32, %arg2: memref<1x16x144xbf16, #tpu.memory_space<vmem>>, %arg3: memref<144x128xbf16, #tpu.memory_space<vmem>>, %arg4: memref<1x128xf32, #tpu.memory_space<vmem>>, %arg5: memref<1x16x128xf32, #tpu.memory_space<vmem>>) attributes {dimension_semantics = [#tpu.dimension_semantics<parallel>, #tpu.dimension_semantics<parallel>], iteration_bounds = array<i64: 2, 4>, scalar_prefetch = 0 : i64, scratch_operands = 0 : i64, tpu.core_type = #tpu.core_type<tc>, window_params = [{transform_indices = @transform_0, window_bounds = array<i64: 1, 16, 144>}, {pipeline_mode = #tpu.pipeline_mode<synchronous>, transform_indices = @transform_1, window_bounds = array<i64: 144, 128>}, {pipeline_mode = #tpu.pipeline_mode<synchronous>, transform_indices = @transform_2, window_bounds = array<i64: 1, 128>}, {transform_indices = @transform_3, window_bounds = array<i64: 1, 16, 128>}]} {
    %c0 = arith.constant 0 : index
    %c0_0 = arith.constant 0 : index
    %c0_1 = arith.constant 0 : index
    %0 = vector.load %arg2[%c0, %c0_0, %c0_1] : memref<1x16x144xbf16, #tpu.memory_space<vmem>>, vector<1x16x144xbf16>
    %1 = vector.shape_cast %0 : vector<1x16x144xbf16> to vector<16x144xbf16>
    %c0_2 = arith.constant 0 : index
    %c0_3 = arith.constant 0 : index
    %2 = vector.load %arg3[%c0_2, %c0_3] : memref<144x128xbf16, #tpu.memory_space<vmem>>, vector<144x128xbf16>
    %cst = arith.constant dense<0.000000e+00> : vector<16x128xf32>
    %3 = tpu.matmul %1, %2, %cst {dimension_numbers = #tpu.dot_dimension_numbers<[1], [0], [0], [1], [0, 0, 1, 1], [], []>} : vector<16x144xbf16>, vector<144x128xbf16>, vector<16x128xf32> -> vector<16x128xf32>
    %c0_4 = arith.constant 0 : index
    %c0_5 = arith.constant 0 : index
    %4 = vector.load %arg4[%c0_4, %c0_5] : memref<1x128xf32, #tpu.memory_space<vmem>>, vector<1x128xf32>
    %5 = vector.broadcast %4 : vector<1x128xf32> to vector<16x128xf32>
    %6 = arith.addf %3, %5 : vector<16x128xf32>
    %cst_6 = arith.constant 0.000000e+00 : f32
    %7 = vector.broadcast %cst_6 : f32 to vector<16x128xf32>
    %8 = arith.cmpf ogt, %6, %7 : vector<16x128xf32>
    %cst_7 = arith.constant 0.00999999977 : f32
    %9 = vector.broadcast %cst_7 : f32 to vector<16x128xf32>
    %10 = arith.mulf %9, %6 : vector<16x128xf32>
    %11 = arith.select %8, %6, %10 : vector<16x128xi1>, vector<16x128xf32>
    %c0_8 = arith.constant 0 : index
    %c0_9 = arith.constant 0 : index
    %c0_10 = arith.constant 0 : index
    %12 = vector.load %arg5[%c0_8, %c0_9, %c0_10] : memref<1x16x128xf32, #tpu.memory_space<vmem>>, vector<1x16x128xf32>
    %13 = vector.shape_cast %12 : vector<1x16x128xf32> to vector<16x128xf32>
    %14 = vector.shape_cast %11 : vector<16x128xf32> to vector<1x16x128xf32>
    tpu.vector_store %arg5[%c0_8, %c0_9, %c0_10], %14 {strides = array<i32>} : memref<1x16x128xf32, #tpu.memory_space<vmem>>, vector<1x16x128xf32>,
    return
  }
  func.func @transform_0(%arg0: i32, %arg1: i32) -> (i32, i32, i32) {
    %c0_i32 = arith.constant 0 : i32
    %c0_i32_0 = arith.constant 0 : i32
    return %arg0, %arg1, %c0_i32 : i32, i32, i32
  }
  func.func @transform_1(%arg0: i32, %arg1: i32) -> (i32, i32) {
    %c0_i32 = arith.constant 0 : i32
    %c0_i32_0 = arith.constant 0 : i32
    %c0_i32_1 = arith.constant 0 : i32
    return %c0_i32, %c0_i32_0 : i32, i32
  }
  func.func @transform_2(%arg0: i32, %arg1: i32) -> (i32, i32) {
    %c0_i32 = arith.constant 0 : i32
    %c0_i32_0 = arith.constant 0 : i32
    %c0_i32_1 = arith.constant 0 : i32
    return %c0_i32, %c0_i32_0 : i32, i32
  }
  func.func @transform_3(%arg0: i32, %arg1: i32) -> (i32, i32, i32) {
    %c0_i32 = arith.constant 0 : i32
    %c0_i32_0 = arith.constant 0 : i32
    return %arg0, %arg1, %c0_i32 : i32, i32, i32
  }
}

</mosaic_0001>

<llo_original>
// kernel: forward.1
$region0: #{forward.1}
  #allocation0 [shape = 'u32[]', space=smem, size = 0x4, offset = 0x4, fixed_abs, tag = 'smem constant byte address 0x4 - core index']
  #allocation1 [shape = 'u32[144,128]{1,0:T(1,128)}', space=vmem, size = 0x12000, scoped, tag = 'internal scratch']
  %s0 = inlined_call_operand.vmem [shape: bf16[2,64,144], index: 0, kind: input, shape index: {}]
  %s1 = inlined_call_operand.vmem [shape: bf16[144,128], index: 1, kind: input, shape index: {}]
  %s2 = inlined_call_operand.vmem [shape: f32[1,128], index: 2, kind: input, shape index: {}]
  %s3 = inlined_call_operand.vmem [shape: f32[2,64,128], index: 3, kind: output, shape index: {}]
  %s4 = sld [smem:[#allocation0]]
  $region45: #{forward.1} parent=0
    _
  %s6 = ssub.s32 1, %s4
  %s7 = scalar_select 0, %s6, %s4
  loop: start=0, step=1, limit=10
  $region2: #{forward.1} parent=0 // loop_pre_header
    _
  $region3: #{forward.1} parent=0 // loop_header
    %s9 = sphi 0, %s13
    %p10 = scmp.ge.s32.totalorder %s9, 10
    %s16 = sphi 0, %s28
    %s17 = sphi 0, %s24
    %s18 = sphi 0, %s16
    %s19 = sphi 0, %s17
    %s20 = sphi 0, %s18
    %s21 = sphi 0, %s19
    %s33 = sphi 0, %s35
    %s36 = sphi 0, %s33
    %s37 = sphi 0, %s36
    %s53 = sphi 0, %s37
    %s57 = sphi 0, %s57
    %s59 = sphi 0, %s57
    %s60 = sphi 0, %s59
    %s74 = sphi 0, %s60
    %s78 = sphi 0, %s78
    %s80 = sphi 0, %s78
    %s81 = sphi 0, %s80
    %s95 = sphi 0, %s81
    %s103 = sphi 0, %s105
    %s106 = sphi 0, %s103
    %s107 = sphi 0, %s106
    %s123 = sphi 0, %s107
  $region4: #{forward.1} parent=0 // loop_header_branch
    %12 = sbr.rel (%p10) target = $region8
  $region5: #{forward.1} parent=0 // loop_body
    %s14 = ssub.s32 %s9, 1
    %s15 = ssub.s32 %s9, 2
    %s22 = sadd.s32 1, %s17
    %p23 = scmp.ge.s32.totalorder %s22, 4
    %s24 = scalar_select %p23, 0, %s22
    %s25 = sadd.s32 1, %s16
    %s26 = scalar_select %p23, %s25, %s16
    %p27 = scmp.ge.s32.totalorder %s26, 2
    %s28 = scalar_select %p27, 0, %s26
    %s29 = ssub.s32 %s16, %s28
    %s30 = ssub.s32 %s17, %s24
    %s31 = sor.u32 %s29, %s30
    %p32 = scmp.eq.s32.totalorder %s31, 0
    %s34 = sadd.s32 %s33, 1
    %s35 = scalar_select %p32, %s33, %s34
    %p38 = pneg %p32
    %p39 = scmp.eq.s32.totalorder %s9, 7
    %p40 = por %p38, %p39
    %p41 = scmp.ne.s32.totalorder %s33, %s36
    %p42 = scmp.eq.s32.totalorder %s9, 0
    %p43 = por %p41, %p42
    %p44 = scmp.ne.s32.totalorder %s33, %s36
    %p45 = scmp.eq.s32.totalorder %s14, 7
    %p46 = por %p44, %p45
    %p47 = scmp.ne.s32.totalorder %s36, %s37
    %p48 = scmp.eq.s32.totalorder %s14, 0
    %p49 = por %p47, %p48
    %p50 = scmp.ne.s32.totalorder %s36, %s37
    %p51 = scmp.eq.s32.totalorder %s15, 7
    %p52 = por %p50, %p51
    %p54 = scmp.ne.s32.totalorder %s37, %s53
    %p55 = scmp.eq.s32.totalorder %s15, 0
    %p56 = por %p54, %p55
    %s58 = sadd.s32 %s57, 1
    %p61 = scmp.eq.s32.totalorder %s9, 7
    %p62 = scmp.ne.s32.totalorder %s57, %s59
    %p63 = scmp.eq.s32.totalorder %s9, 0
    %p64 = por %p62, %p63
    %p65 = scmp.ne.s32.totalorder %s57, %s59
    %p66 = scmp.eq.s32.totalorder %s14, 7
    %p67 = por %p65, %p66
    %p68 = scmp.ne.s32.totalorder %s59, %s60
    %p69 = scmp.eq.s32.totalorder %s14, 0
    %p70 = por %p68, %p69
    %p71 = scmp.ne.s32.totalorder %s59, %s60
    %p72 = scmp.eq.s32.totalorder %s15, 7
    %p73 = por %p71, %p72
    %p75 = scmp.ne.s32.totalorder %s60, %s74
    %p76 = scmp.eq.s32.totalorder %s15, 0
    %p77 = por %p75, %p76
    %s79 = sadd.s32 %s78, 1
    %p82 = scmp.eq.s32.totalorder %s9, 7
    %p83 = scmp.ne.s32.totalorder %s78, %s80
    %p84 = scmp.eq.s32.totalorder %s9, 0
    %p85 = por %p83, %p84
    %p86 = scmp.ne.s32.totalorder %s78, %s80
    %p87 = scmp.eq.s32.totalorder %s14, 7
    %p88 = por %p86, %p87
    %p89 = scmp.ne.s32.totalorder %s80, %s81
    %p90 = scmp.eq.s32.totalorder %s14, 0
    %p91 = por %p89, %p90
    %p92 = scmp.ne.s32.totalorder %s80, %s81
    %p93 = scmp.eq.s32.totalorder %s15, 7
    %p94 = por %p92, %p93
    %p96 = scmp.ne.s32.totalorder %s81, %s95
    %p97 = scmp.eq.s32.totalorder %s15, 0
    %p98 = por %p96, %p97
    %s99 = ssub.s32 %s16, %s28
    %s100 = ssub.s32 %s17, %s24
    %s101 = sor.u32 %s99, %s100
    %p102 = scmp.eq.s32.totalorder %s101, 0
    %s104 = sadd.s32 %s103, 1
    %s105 = scalar_select %p102, %s103, %s104
    %p108 = pneg %p102
    %p109 = scmp.eq.s32.totalorder %s9, 7
    %p110 = por %p108, %p109
    %p111 = scmp.ne.s32.totalorder %s103, %s106
    %p112 = scmp.eq.s32.totalorder %s9, 0
    %p113 = por %p111, %p112
    %p114 = scmp.ne.s32.totalorder %s103, %s106
    %p115 = scmp.eq.s32.totalorder %s14, 7
    %p116 = por %p114, %p115
    %p117 = scmp.ne.s32.totalorder %s106, %s107
    %p118 = scmp.eq.s32.totalorder %s14, 0
    %p119 = por %p117, %p118
    %p120 = scmp.ne.s32.totalorder %s106, %s107
    %p121 = scmp.eq.s32.totalorder %s15, 7
    %p122 = por %p120, %p121
    %p124 = scmp.ne.s32.totalorder %s107, %s123
    %p125 = scmp.eq.s32.totalorder %s15, 0
    %p126 = por %p124, %p125
    %p127 = scmp.le.s32.totalorder 1, %s9
    %p128 = scmp.lt.s32.totalorder %s9, 9
    %p129 = pnand %p127, %p128
    %p130 = pneg %p129
    // Predicated region
    $region9: #{forward.1} parent=5 // pred_check
      _
    $region10: #{forward.1} parent=5 // pred_check_branch
      %132 = sbr.rel (%p129) target = $region12
    $region11: #{forward.1} parent=5 // pred_region
      %s133 = ssub.s32 %s9, 1
      // Predicated region
      $region13: #{forward.1} parent=11 // pred_check
        %p134 = pneg %p70
      $region14: #{forward.1} parent=11 // pred_check_branch
        %136 = sbr.rel (%p134) target = $region16
      $region15: #{forward.1} parent=11 // pred_region
        _
      $region16: #{forward.1} parent=11 // pred_fallthru
        _
      // Predicated region
      $region17: #{forward.1} parent=11 // pred_check
        %p137 = pneg %p91
      $region18: #{forward.1} parent=11 // pred_check_branch
        %139 = sbr.rel (%p137) target = $region20
      $region19: #{forward.1} parent=11 // pred_region
        _
      $region20: #{forward.1} parent=11 // pred_fallthru
        _
    $region12: #{forward.1} parent=5 // pred_fallthru
      _
    %p140 = scmp.lt.s32.totalorder %s9, 8
    // Predicated region
    $region21: #{forward.1} parent=5 // pred_check
      %p141 = pneg %p140
    $region22: #{forward.1} parent=5 // pred_check_branch
      %143 = sbr.rel (%p141) target = $region24
    $region23: #{forward.1} parent=5 // pred_region
      // Predicated region
      $region25: #{forward.1} parent=23 // pred_check
        %p144 = pneg %p43
      $region26: #{forward.1} parent=23 // pred_check_branch
        %146 = sbr.rel (%p144) target = $region28
      $region27: #{forward.1} parent=23 // pred_region
        %s147 = smul.u32 2, %s17
        %p148 = scmp.lt.s32.totalorder %s16, 1
        %s149 = scalar_select %p148, %s16, 1
        %p150 = scmp.lt.s32.totalorder %s147, 7
        %s151 = scalar_select %p150, %s147, 7
        %s152 = smul.addr %s151, 2
        %s153 = smul.addr %s149, 16
        %s154 = sadd.s32 %s152, %s153
        %s155 = smul.addr %s154, 4
        %s156 = scalar_lea.vmem %s0, %s155
        %s157 = smul.u32 2, %s17
      $region28: #{forward.1} parent=23 // pred_fallthru
        _
    $region24: #{forward.1} parent=5 // pred_fallthru
      _
    %p158 = scmp.le.s32.totalorder 1, %s9
    %p159 = scmp.lt.s32.totalorder %s9, 9
    %p160 = pnand %p158, %p159
    %p161 = pneg %p160
    // Predicated region
    $region29: #{forward.1} parent=5 // pred_check
      _
    $region30: #{forward.1} parent=5 // pred_check_branch
      %163 = sbr.rel (%p160) target = $region32
    $region31: #{forward.1} parent=5 // pred_region
      %s164 = ssub.s32 %s9, 1
      %s165 = smul.u32 2, %s19
      %p166 = scmp.lt.s32.totalorder %s18, 1
      %s167 = scalar_select %p166, %s18, 1
      %p168 = scmp.lt.s32.totalorder %s165, 7
      %s169 = scalar_select %p168, %s165, 7
      %s170 = smul.addr %s169, 2
      %s171 = smul.addr %s167, 16
      %s172 = sadd.s32 %s170, %s171
      %s173 = smul.addr %s172, 4
      %s174 = scalar_lea.vmem %s0, %s173
      %p175 = pneg %p49
      %p176 = pneg %p46
      %p177 = pneg %p70
      %p178 = pneg %p67
      %p179 = pneg %p91
      %p180 = pneg %p88
      %p181 = pneg %p119
      %p182 = pneg %p116
      %s183 = smul.u32 2, %s19
      %p184 = scmp.lt.s32.totalorder %s18, 1
      %s185 = scalar_select %p184, %s18, 1
      %p186 = scmp.lt.s32.totalorder %s183, 7
      %s187 = scalar_select %p186, %s183, 7
      %s188 = smul.addr %s185, 8
      %s189 = sadd.s32 %s187, %s188
      %s190 = smul.addr %s189, 8
      %s191 = scalar_lea.vmem %s3, %s190
      %s192 = smul.u32 2, %s19
      %p193 = scmp.lt.s32.totalorder %s18, 1
      %s194 = scalar_select %p193, %s18, 1
      %p195 = scmp.lt.s32.totalorder %s192, 7
      %s196 = scalar_select %p195, %s192, 7
      %s197 = smul.addr %s196, 2
      %s198 = smul.addr %s194, 16
      %s199 = sadd.s32 %s197, %s198
      %s200 = smul.addr %s199, 4
      %s201 = scalar_lea.vmem %s0, %s200
      %s202 = smul.u32 2, %s19
      %s203 = smul.u32 2, %s19
      %p204 = scmp.lt.s32.totalorder %s18, 1
      %s205 = scalar_select %p204, %s18, 1
      %p206 = scmp.lt.s32.totalorder %s203, 7
      %s207 = scalar_select %p206, %s203, 7
      %s208 = smul.addr %s205, 8
      %s209 = sadd.s32 %s207, %s208
      %s210 = smul.addr %s209, 8
      %s211 = scalar_lea.vmem %s3, %s210
      %s212 = smul.u32 2, %s19
      %v214 = vld [vmem:[%s201] sm:$0xff]
      %v215 = vld [vmem:[%s201 + $0x8] sm:$0xff]
      %v216 = vld [vmem:[%s1] sm:$0xf]
      %v217 = vld [vmem:[%s1 + $0x4] sm:$0xf]
      %v218 = vld [vmem:[%s1 + $0x8] sm:$0xf]
      %v219 = vld [vmem:[%s1 + $0xc] sm:$0xf]
      %v220 = vld [vmem:[%s1 + $0x10] sm:$0xf]
      %v221 = vld [vmem:[%s1 + $0x14] sm:$0xf]
      %v222 = vld [vmem:[%s1 + $0x18] sm:$0xf]
      %v223 = vld [vmem:[%s1 + $0x1c] sm:$0xf]
      %v224 = vld [vmem:[%s1 + $0x20] sm:$0xf]
      %v225 = vld [vmem:[%s1 + $0x24] sm:$0xf]
      %v226 = vld [vmem:[%s1 + $0x28] sm:$0xf]
      %v227 = vld [vmem:[%s1 + $0x2c] sm:$0xf]
      %v228 = vld [vmem:[%s1 + $0x30] sm:$0xf]
      %v229 = vld [vmem:[%s1 + $0x34] sm:$0xf]
      %v230 = vld [vmem:[%s1 + $0x38] sm:$0xf]
      %v231 = vld [vmem:[%s1 + $0x3c] sm:$0xf]
      %v232 = vld [vmem:[%s1 + $0x40] sm:$0xf]
      %v233 = vld [vmem:[%s1 + $0x44] sm:$0xf]
      %v234 = vld [vmem:[%s2] sm:$0x1]
      %v236 = vlaneseq
      %v237 = vshrl.u32 %v236, 7
      %v238 = vsub.s32 0, %v237
      %v239 = vrot.slane %v234, %v238
      %v243 = vunpack.c.l.b16 %v214
      %v244 = vunpack.c.h.b16 %v214
      %v245 = vunpack.c.l.b16 %v215
      %v246 = vunpack.c.h.b16 %v215
      %v247 = vpack.c.b16 %v245, %v243
      %v248 = vpack.c.b16 %v246, %v244
      %v268 = vunpack.c.l.b16 %v216
      %v269 = vunpack.c.l.b16 %v217
      %v270 = vunpack.c.l.b16 %v218
      %v271 = vunpack.c.l.b16 %v219
      %v272 = vunpack.c.l.b16 %v220
      %v273 = vunpack.c.l.b16 %v221
      %v274 = vunpack.c.l.b16 %v222
      %v275 = vunpack.c.l.b16 %v223
      %v276 = vunpack.c.l.b16 %v224
      %v277 = vunpack.c.l.b16 %v225
      %v278 = vunpack.c.l.b16 %v226
      %v279 = vunpack.c.l.b16 %v227
      %v280 = vunpack.c.l.b16 %v228
      %v281 = vunpack.c.l.b16 %v229
      %v282 = vunpack.c.l.b16 %v230
      %v283 = vunpack.c.l.b16 %v231
      %v284 = vunpack.c.l.b16 %v232
      %v285 = vunpack.c.l.b16 %v233
      %v286 = vpack.c.b16 %v269, %v268
      %v287 = vpack.c.b16 %v271, %v270
      %v288 = vpack.c.b16 %v273, %v272
      %v289 = vpack.c.b16 %v275, %v274
      %v290 = vpack.c.b16 %v277, %v276
      %v291 = vpack.c.b16 %v279, %v278
      %v292 = vpack.c.b16 %v281, %v280
      %v293 = vpack.c.b16 %v283, %v282
      %v294 = vpack.c.b16 %v285, %v284
      %vm304 = vcmask 130048
      %v306 = vsel %vm304, %v248, 0
      %308 = vmatprep.subr.bf16.mxu0 0
      %309 = vmatpush1.bf16.msra.mxu0 %v293
      %310 = vmatprep.subr.bf16.mxu0 0
      %311 = vmatpush1.bf16.msra.mxu0 %v292
      %312 = vmatprep.subr.bf16.mxu0 0
      %313 = vmatpush1.bf16.msra.mxu0 %v291
      %314 = vmatprep.subr.bf16.mxu0 0
      %315 = vmatpush1.bf16.msra.mxu0 %v290
      %316 = vmatprep.subr.bf16.mxu0 0
      %317 = vmatpush1.bf16.msra.mxu0 %v289
      %318 = vmatprep.subr.bf16.mxu0 0
      %319 = vmatpush1.bf16.msra.mxu0 %v288
      %320 = vmatprep.subr.bf16.mxu0 0
      %321 = vmatpush1.bf16.msra.mxu0 %v287
      %322 = vmatprep.subr.bf16.mxu0 0
      %323 = vmatpush1.bf16.msra.mxu0 %v286
      %324 = vmatprep.subr.bf16.mxu0 0
      %325 = vmatpush2.bf16.msra.mxu0 0
      %326 = vmatprep.subr.bf16.mxu0 0
      %327 = vmatpush2.bf16.msra.mxu0 0
      %328 = vmatprep.subr.bf16.mxu0 0
      %329 = vmatpush2.bf16.msra.mxu0 0
      %330 = vmatprep.subr.bf16.mxu0 0
      %331 = vmatpush2.bf16.msra.mxu0 0
      %332 = vmatprep.subr.bf16.mxu0 0
      %333 = vmatpush2.bf16.msra.mxu0 0
      %334 = vmatprep.subr.bf16.mxu0 0
      %335 = vmatpush2.bf16.msra.mxu0 0
      %336 = vmatprep.subr.bf16.mxu0 0
      %337 = vmatpush2.bf16.msra.mxu0 0
      %338 = vmatprep.subr.bf16.mxu0 0
      %339 = vmatpush2.bf16.msra.mxu0 %v294
      %340 = vmatprep.mubr.bf16.mxu0 %v306
      %341 = vmatmul.mubr.bf16.gmra.mxu0 %v247
      %v342 = vpop.f32.mrf.mxu0
      %v343 = vadd.f32 %v239, %v342
      %v344 = vpop.f32.mrf.mxu0
      %v345 = vpop.f32.mrf.mxu0
      %v346 = vadd.f32 %v239, %v345
      %v347 = vpop.f32.mrf.mxu0
      %348 = vdwg.mxu0
      %vm349 = vcmp.gt.f32.partialorder %v343, 0.0
      %vm350 = vcmp.gt.f32.partialorder %v346, 0.0
      %v351 = vmul.f32 %v343, 0.01
      %v352 = vmul.f32 %v346, 0.01
      %v353 = vsel %vm349, %v343, %v351
      %v354 = vsel %vm350, %v346, %v352
      %355 = vst [vmem:[%s211] sm:$0xff] %v353
      %356 = vst [vmem:[%s211 + $0x8] sm:$0xff] %v354
      %s357 = smul.u32 2, %s19
      %p358 = scmp.lt.s32.totalorder %s18, 1
      %s359 = scalar_select %p358, %s18, 1
      %p360 = scmp.lt.s32.totalorder %s357, 7
      %s361 = scalar_select %p360, %s357, 7
      %s362 = smul.addr %s359, 8
      %s363 = sadd.s32 %s361, %s362
      %s364 = smul.addr %s363, 8
      %s365 = scalar_lea.vmem %s3, %s364
      // Predicated region
      $region33: #{forward.1} parent=31 // pred_check
        %p366 = pneg %p116
      $region34: #{forward.1} parent=31 // pred_check_branch
        %368 = sbr.rel (%p366) target = $region36
      $region35: #{forward.1} parent=31 // pred_region
        %s369 = smul.u32 2, %s19
      $region36: #{forward.1} parent=31 // pred_fallthru
        _
    $region32: #{forward.1} parent=5 // pred_fallthru
      _
    %p370 = scmp.le.s32.totalorder 2, %s9
    // Predicated region
    $region37: #{forward.1} parent=5 // pred_check
      %p371 = pneg %p370
    $region38: #{forward.1} parent=5 // pred_check_branch
      %373 = sbr.rel (%p371) target = $region40
    $region39: #{forward.1} parent=5 // pred_region
      %s374 = ssub.s32 %s9, 2
      // Predicated region
      $region41: #{forward.1} parent=39 // pred_check
        %p375 = pneg %p122
      $region42: #{forward.1} parent=39 // pred_check_branch
        %377 = sbr.rel (%p375) target = $region44
      $region43: #{forward.1} parent=39 // pred_region
        %s378 = smul.u32 2, %s21
        %p379 = scmp.lt.s32.totalorder %s20, 1
        %s380 = scalar_select %p379, %s20, 1
        %p381 = scmp.lt.s32.totalorder %s378, 7
        %s382 = scalar_select %p381, %s378, 7
        %s383 = smul.addr %s380, 8
        %s384 = sadd.s32 %s382, %s383
        %s385 = smul.addr %s384, 8
        %s386 = scalar_lea.vmem %s3, %s385
      $region44: #{forward.1} parent=39 // pred_fallthru
        _
    $region40: #{forward.1} parent=5 // pred_fallthru
      _
  $region6: #{forward.1} parent=0 // loop_footer
    %s13 = sadd.s32 1, %s9
  $region7: #{forward.1} parent=0 // loop_footer_branch
    %8 = sbr.rel target = $region3
  $region8: #{forward.1} parent=0 // loop_exit
    _

</llo_original>
